<compile_context>
chip_gen: v7x
topology: tpu7x:2x2x1
jax: 0.10.0
libtpu: 0.0.40
codegen_flags: <defaults>
</compile_context>

<pallas_src>
import math

import jax
import jax.numpy as jnp
from jax.experimental import pallas as pl
from jax.experimental.pallas import tpu as pltpu


def _round_up(n, m):
    return -(-n // m) * m


def fcdisc_kernel(x_ref, w1_ref, b1_ref, w2_ref, b2_ref, o_ref):
    # x_ref : [TB, Dp] (bf16/f32)   w1_ref: [Dp, H] (same dtype as x)
    # b1_ref: [1, H]  f32           w2_ref: [1, H]  f32  (row form of W2)
    # b2_ref: [1, 1]  f32           o_ref : [1, 1, TB] f32 (lane-dense row)

    # Linear 1 on the MXU, f32 accumulation.
    h = jnp.dot(x_ref[...], w1_ref[...], preferred_element_type=jnp.float32)
    h = h + b1_ref[...]
    # LeakyReLU(negative_slope=0.01), f32 VPU math (safe on v5e too).
    h = jnp.where(h >= 0.0, h, 0.01 * h)

    # Linear 2 (128 -> 1): VPU multiply + lane reduction instead of an N=1
    # MXU matmul; result is one value per batch row, laid out on lanes.
    z = jnp.sum(h * w2_ref[...], axis=-1)          # [TB]
    z = z[None, :] + b2_ref[...]                   # [1, TB]

    # Numerically stable sigmoid: exp on the EUP, reciprocal via pl.reciprocal.
    ez = jnp.exp(-jnp.abs(z))
    inv = pl.reciprocal(1.0 + ez, approx=False)
    sig = jnp.where(z >= 0.0, inv, ez * inv)

    o_ref[...] = sig[None].astype(o_ref.dtype)


def fcdisc_forward(x, w1, b1, w2, b2, *, block_b=1024,
                   compute_dtype=jnp.bfloat16):
    """x: [B, D] f32 -> [B, 1] f32.

    block_b: batch tile (rows). 1024 keeps 2x double-buffered bf16 x tiles
    well under the scoped VMEM limit on all generations (incl. v7x's 64 MiB
    physical / 32 MiB scoped); sweep 1024-4096 for large D if desired.
    """
    B, D = x.shape
    H = w1.shape[1]
    assert w1.shape == (D, H)
    assert b1.shape == (1, H)
    assert w2.shape == (H, 1)
    assert b2.shape == (1, 1)

    # Lane-align the feature dim; batch tile is a multiple of 128 so the
    # (1, TB) output rows are lane-dense and x tiles satisfy (8,128) tiling.
    Dp = _round_up(D, 128)
    TB = min(block_b, _round_up(B, 128))
    Bp = _round_up(B, TB)
    G = Bp // TB

    x_p = jnp.pad(x, ((0, Bp - B), (0, Dp - D))).astype(compute_dtype)
    w1_p = jnp.pad(w1, ((0, Dp - D), (0, 0))).astype(compute_dtype)
    b1_p = b1.astype(jnp.float32)
    w2_row = w2.reshape(1, H).astype(jnp.float32)
    b2_p = b2.astype(jnp.float32)

    itemsize = jnp.dtype(compute_dtype).itemsize
    cost = pl.CostEstimate(
        flops=2 * Bp * Dp * H + 3 * Bp * H,
        transcendentals=2 * Bp,
        bytes_accessed=(Bp * Dp + Dp * H) * itemsize + (2 * H + 1 + Bp) * 4,
    )

    out = pl.pallas_call(
        fcdisc_kernel,
        out_shape=jax.ShapeDtypeStruct((G, 1, TB), jnp.float32),
        grid_spec=pltpu.PrefetchScalarGridSpec(
            num_scalar_prefetch=0,
            grid=(G,),
            in_specs=[
                pl.BlockSpec((TB, Dp), lambda i: (i, 0)),   # x: tiled over batch
                pl.BlockSpec((Dp, H), lambda i: (0, 0)),    # W1: stays resident
                pl.BlockSpec((1, H), lambda i: (0, 0)),     # b1
                pl.BlockSpec((1, H), lambda i: (0, 0)),     # W2 row
                pl.BlockSpec((1, 1), lambda i: (0, 0)),     # b2
            ],
            out_specs=pl.BlockSpec((1, 1, TB), lambda i: (i, 0, 0)),
        ),
        compiler_params=pltpu.CompilerParams(
            dimension_semantics=("parallel",),   # megacore sharding on v7x
        ),
        cost_estimate=cost,
    )(x_p, w1_p, b1_p, w2_row, b2_p)

    # (G, 1, TB) -> (B, 1), dropping batch padding.
    return out.reshape(Bp)[:B].reshape(B, 1)


def init_params(key, img_dim, hidden=128):
    """PyTorch nn.Linear-style init (uniform +/- 1/sqrt(fan_in))."""
    k1, k2, k3, k4 = jax.random.split(key, 4)
    bound1 = 1.0 / math.sqrt(img_dim)
    bound2 = 1.0 / math.sqrt(hidden)
    w1 = jax.random.uniform(k1, (img_dim, hidden), jnp.float32, -bound1, bound1)
    b1 = jax.random.uniform(k2, (1, hidden), jnp.float32, -bound1, bound1)
    w2 = jax.random.uniform(k3, (hidden, 1), jnp.float32, -bound2, bound2)
    b2 = jax.random.uniform(k4, (1, 1), jnp.float32, -bound2, bound2)
    return w1, b1, w2, b2


if __name__ == "__main__":
    key = jax.random.PRNGKey(0)
    kx, kp = jax.random.split(key)

    B, IMG_DIM = 8, 64  # small synthetic shapes consistent with FCDisc(img_dim)
    x = jax.random.normal(kx, (B, IMG_DIM), jnp.float32)
    w1, b1, w2, b2 = init_params(kp, IMG_DIM)

    out_bf16 = jax.block_until_ready(fcdisc_forward(x, w1, b1, w2, b2))
    out_f32 = jax.block_until_ready(
        fcdisc_forward(x, w1, b1, w2, b2, compute_dtype=jnp.float32))

    # Pure-JAX reference (high-precision matmuls).
    hi = jax.lax.Precision.HIGHEST
    h_ref = jnp.dot(x, w1, precision=hi) + b1
    h_ref = jnp.where(h_ref >= 0, h_ref, 0.01 * h_ref)
    ref = jax.nn.sigmoid(jnp.dot(h_ref, w2, precision=hi) + b2)

    assert out_bf16.shape == (B, 1) and out_f32.shape == (B, 1)
    assert jnp.allclose(out_f32, ref, atol=5e-4), "f32 kernel mismatch vs reference"
    assert jnp.allclose(out_bf16, ref, atol=2e-2), "bf16 kernel mismatch vs reference"

    print("KERNEL_OK")
</pallas_src>

<mosaic_0001>
module attributes {stable_mosaic.version = 11 : i64} {
  func.func @fcdisc_kernel(%arg0: i32, %arg1: memref<128x128xbf16, #tpu.memory_space<vmem>>, %arg2: memref<128x128xbf16, #tpu.memory_space<vmem>>, %arg3: memref<1x128xf32, #tpu.memory_space<vmem>>, %arg4: memref<1x128xf32, #tpu.memory_space<vmem>>, %arg5: memref<1x1xf32, #tpu.memory_space<vmem>>, %arg6: memref<1x1x128xf32, #tpu.memory_space<vmem>>) attributes {dimension_semantics = [#tpu.dimension_semantics<parallel>], iteration_bounds = array<i64: 1>, scalar_prefetch = 0 : i64, scratch_operands = 0 : i64, tpu.core_type = #tpu.core_type<tc>, window_params = [{transform_indices = @transform_0, window_bounds = array<i64: 128, 128>}, {pipeline_mode = #tpu.pipeline_mode<synchronous>, transform_indices = @transform_1, window_bounds = array<i64: 128, 128>}, {pipeline_mode = #tpu.pipeline_mode<synchronous>, transform_indices = @transform_2, window_bounds = array<i64: 1, 128>}, {pipeline_mode = #tpu.pipeline_mode<synchronous>, transform_indices = @transform_3, window_bounds = array<i64: 1, 128>}, {pipeline_mode = #tpu.pipeline_mode<synchronous>, transform_indices = @transform_4, window_bounds = array<i64: 1, 1>}, {transform_indices = @transform_5, window_bounds = array<i64: 1, 1, 128>}]} {
    %c0 = arith.constant 0 : index
    %c0_0 = arith.constant 0 : index
    %0 = vector.load %arg1[%c0, %c0_0] : memref<128x128xbf16, #tpu.memory_space<vmem>>, vector<128x128xbf16>
    %c0_1 = arith.constant 0 : index
    %c0_2 = arith.constant 0 : index
    %1 = vector.load %arg2[%c0_1, %c0_2] : memref<128x128xbf16, #tpu.memory_space<vmem>>, vector<128x128xbf16>
    %cst = arith.constant dense<0.000000e+00> : vector<128x128xf32>
    %2 = tpu.matmul %0, %1, %cst {dimension_numbers = #tpu.dot_dimension_numbers<[1], [0], [0], [1], [0, 0, 1, 1], [], []>} : vector<128x128xbf16>, vector<128x128xbf16>, vector<128x128xf32> -> vector<128x128xf32>
    %c0_3 = arith.constant 0 : index
    %c0_4 = arith.constant 0 : index
    %3 = vector.load %arg3[%c0_3, %c0_4] : memref<1x128xf32, #tpu.memory_space<vmem>>, vector<1x128xf32>
    %4 = vector.broadcast %3 : vector<1x128xf32> to vector<128x128xf32>
    %5 = arith.addf %2, %4 : vector<128x128xf32>
    %cst_5 = arith.constant 0.000000e+00 : f32
    %6 = vector.broadcast %cst_5 : f32 to vector<128x128xf32>
    %7 = arith.cmpf oge, %5, %6 : vector<128x128xf32>
    %cst_6 = arith.constant 0.00999999977 : f32
    %8 = vector.broadcast %cst_6 : f32 to vector<128x128xf32>
    %9 = arith.mulf %8, %5 : vector<128x128xf32>
    %10 = arith.select %7, %5, %9 : vector<128x128xi1>, vector<128x128xf32>
    %c0_7 = arith.constant 0 : index
    %c0_8 = arith.constant 0 : index
    %11 = vector.load %arg4[%c0_7, %c0_8] : memref<1x128xf32, #tpu.memory_space<vmem>>, vector<1x128xf32>
    %12 = vector.broadcast %11 : vector<1x128xf32> to vector<128x128xf32>
    %13 = arith.mulf %10, %12 : vector<128x128xf32>
    %cst_9 = arith.constant dense<0.000000e+00> : vector<128xf32>
    %14 = vector.multi_reduction <add>, %13, %cst_9 [1] : vector<128x128xf32> to vector<128xf32>
    %15 = vector.shape_cast %14 : vector<128xf32> to vector<1x128xf32>
    %c0_10 = arith.constant 0 : index
    %c0_11 = arith.constant 0 : index
    %16 = vector.load %arg5[%c0_10, %c0_11] : memref<1x1xf32, #tpu.memory_space<vmem>>, vector<1x1xf32>
    %17 = vector.broadcast %16 : vector<1x1xf32> to vector<1x128xf32>
    %18 = arith.addf %15, %17 : vector<1x128xf32>
    %19 = math.absf %18 : vector<1x128xf32>
    %cst_12 = arith.constant 0.000000e+00 : f32
    %20 = vector.broadcast %cst_12 : f32 to vector<1x128xf32>
    %21 = arith.subf %20, %19 : vector<1x128xf32>
    %22 = math.exp %21 : vector<1x128xf32>
    %cst_13 = arith.constant 1.000000e+00 : f32
    %23 = vector.broadcast %cst_13 : f32 to vector<1x128xf32>
    %24 = arith.addf %23, %22 : vector<1x128xf32>
    %25 = tpu.reciprocal %24 : vector<1x128xf32> -> vector<1x128xf32>
    %cst_14 = arith.constant 0.000000e+00 : f32
    %26 = vector.broadcast %cst_14 : f32 to vector<1x128xf32>
    %27 = arith.cmpf oge, %18, %26 : vector<1x128xf32>
    %28 = arith.mulf %22, %25 : vector<1x128xf32>
    %29 = arith.select %27, %25, %28 : vector<1x128xi1>, vector<1x128xf32>
    %30 = vector.shape_cast %29 : vector<1x128xf32> to vector<1x1x128xf32>
    %c0_15 = arith.constant 0 : index
    %c0_16 = arith.constant 0 : index
    %c0_17 = arith.constant 0 : index
    %31 = vector.load %arg6[%c0_15, %c0_16, %c0_17] : memref<1x1x128xf32, #tpu.memory_space<vmem>>, vector<1x1x128xf32>
    tpu.vector_store %arg6[%c0_15, %c0_16, %c0_17], %30 {strides = array<i32>} : memref<1x1x128xf32, #tpu.memory_space<vmem>>, vector<1x1x128xf32>,
    return
  }
  func.func @transform_0(%arg0: i32) -> (i32, i32) {
    %c0_i32 = arith.constant 0 : i32
    %c0_i32_0 = arith.constant 0 : i32
    return %arg0, %c0_i32 : i32, i32
  }
  func.func @transform_1(%arg0: i32) -> (i32, i32) {
    %c0_i32 = arith.constant 0 : i32
    %c0_i32_0 = arith.constant 0 : i32
    %c0_i32_1 = arith.constant 0 : i32
    return %c0_i32, %c0_i32_0 : i32, i32
  }
  func.func @transform_2(%arg0: i32) -> (i32, i32) {
    %c0_i32 = arith.constant 0 : i32
    %c0_i32_0 = arith.constant 0 : i32
    %c0_i32_1 = arith.constant 0 : i32
    return %c0_i32, %c0_i32_0 : i32, i32
  }
  func.func @transform_3(%arg0: i32) -> (i32, i32) {
    %c0_i32 = arith.constant 0 : i32
    %c0_i32_0 = arith.constant 0 : i32
    %c0_i32_1 = arith.constant 0 : i32
    return %c0_i32, %c0_i32_0 : i32, i32
  }
  func.func @transform_4(%arg0: i32) -> (i32, i32) {
    %c0_i32 = arith.constant 0 : i32
    %c0_i32_0 = arith.constant 0 : i32
    %c0_i32_1 = arith.constant 0 : i32
    return %c0_i32, %c0_i32_0 : i32, i32
  }
  func.func @transform_5(%arg0: i32) -> (i32, i32, i32) {
    %c0_i32 = arith.constant 0 : i32
    %c0_i32_0 = arith.constant 0 : i32
    %c0_i32_1 = arith.constant 0 : i32
    return %arg0, %c0_i32, %c0_i32_0 : i32, i32, i32
  }
}

</mosaic_0001>

<llo_original>
// kernel: tpu_custom_call.1
$region0: #{tpu_custom_call.1}
  #allocation0 [shape = 'u32[]', space=smem, size = 0x4, offset = 0x4, fixed_abs, tag = 'smem constant byte address 0x4 - core index']
  #allocation1 [shape = 'u32[144,128]{1,0:T(1,128)}', space=vmem, size = 0x12000, scoped, tag = 'internal scratch']
  #allocation2 [shape = 'f32[1,1]{1,0:T(1,128)S(1)}', space=vmem, size = 0x200, scoped, tag = 'scoped memory for tpu_custom_call.1']
  %s0 = inlined_call_operand.hbm [shape: bf16[128,128], index: 0, kind: input, shape index: {}]
  %s1 = inlined_call_operand.hbm [shape: bf16[128,128], index: 1, kind: input, shape index: {}]
  %s2 = inlined_call_operand.vmem [shape: f32[1,128], index: 2, kind: input, shape index: {}]
  %s3 = inlined_call_operand.vmem [shape: f32[1,128], index: 3, kind: input, shape index: {}]
  %s4 = inlined_call_operand.<no memory space> [shape: f32[1,1], index: 4, kind: input, shape index: {}]
  %s5 = inlined_call_operand.hbm [shape: f32[1,1,128], index: 5, kind: output, shape index: {}]
  %s6 = sld [smem:[#allocation0]]
  $region38: #{tpu_custom_call.1} parent=0
    _
  %s8 = ssub.s32 1, %s6
  %s9 = scalar_select 0, %s8, %s6
  %v10 = vstv %s4
  %11 = vst [vmem:[#allocation2] sm:$0x1] %v10
  $region1: #{tpu_custom_call.1} parent=0
    #allocation3 [shape = 'u8[32768]{0}', space=vmem, size = 0x8000, scoped, tag = 'input window, operand 0, single buffered']
    #allocation4 [shape = 's32[1]{0}', space=sflag, size = 0x4, scoped, tag = 'scoped memory for tpu_custom_call.1']
    #allocation5 [shape = 's32[1]{0}', space=sflag, size = 0x4, scoped, tag = 'scoped memory for tpu_custom_call.1']
    #allocation6 [shape = 'u8[32768]{0}', space=vmem, size = 0x8000, scoped, tag = 'input window, operand 1, single buffered']
    #allocation7 [shape = 's32[1]{0}', space=sflag, size = 0x4, scoped, tag = 'scoped memory for tpu_custom_call.1']
    #allocation8 [shape = 'u8[512]{0}', space=vmem, size = 0x400, scoped, tag = 'output window, operand 0, single buffered']
    %12 = vsyncpa [#allocation4], 0
    %13 = vsyncpa [#allocation7], 0
    %14 = vsyncpa [#allocation5], 0
    // Predicated region
    $region2: #{tpu_custom_call.1} parent=1 // pred_check
      _
    $region3: #{tpu_custom_call.1} parent=1 // pred_check_branch
      %16 = sbr.rel (0) target = $region5
    $region4: #{tpu_custom_call.1} parent=1 // pred_region
      %s18 = ssub.s32 1024, 1024
      %19 = vsyncadd [#allocation4], %s18
      %s20 = sshll.u32 [#allocation3], 4
      %s21 = int_to_ptr.vmem [resolvable:$true] %s20
      %26 = dma.hbm_to_vmem [thread:$0]  %s0, 1024, %s21, [#allocation4], 64, 64, 4
    $region5: #{tpu_custom_call.1} parent=1 // pred_fallthru
      _
    // Predicated region
    $region6: #{tpu_custom_call.1} parent=1 // pred_check
      _
    $region7: #{tpu_custom_call.1} parent=1 // pred_check_branch
      %28 = sbr.rel (0) target = $region9
    $region8: #{tpu_custom_call.1} parent=1 // pred_region
      %s30 = ssub.s32 1024, 1024
      %31 = vsyncadd [#allocation7], %s30
      %s32 = sshll.u32 [#allocation6], 4
      %s33 = int_to_ptr.vmem [resolvable:$true] %s32
      %38 = dma.hbm_to_vmem [thread:$0]  %s1, 1024, %s33, [#allocation7], 64, 64, 4
    $region9: #{tpu_custom_call.1} parent=1 // pred_fallthru
      _
    // Predicated region
    $region10: #{tpu_custom_call.1} parent=1 // pred_check
      _
    $region11: #{tpu_custom_call.1} parent=1 // pred_check_branch
      %40 = sbr.rel (0) target = $region13
    $region12: #{tpu_custom_call.1} parent=1 // pred_region
      _
    $region13: #{tpu_custom_call.1} parent=1 // pred_fallthru
      _
    // Predicated region
    $region14: #{tpu_custom_call.1} parent=1 // pred_check
      _
    $region15: #{tpu_custom_call.1} parent=1 // pred_check_branch
      %42 = sbr.rel (0) target = $region17
    $region16: #{tpu_custom_call.1} parent=1 // pred_region
      _
    $region17: #{tpu_custom_call.1} parent=1 // pred_fallthru
      _
    // Predicated region
    $region18: #{tpu_custom_call.1} parent=1 // pred_check
      _
    $region19: #{tpu_custom_call.1} parent=1 // pred_check_branch
      %44 = sbr.rel (0) target = $region21
    $region20: #{tpu_custom_call.1} parent=1 // pred_region
      _
    $region21: #{tpu_custom_call.1} parent=1 // pred_fallthru
      _
    // Predicated region
    $region22: #{tpu_custom_call.1} parent=1 // pred_check
      _
    $region23: #{tpu_custom_call.1} parent=1 // pred_check_branch
      %46 = sbr.rel (0) target = $region25
    $region24: #{tpu_custom_call.1} parent=1 // pred_region
      %47 = dma.done [#allocation4], 1024
    $region25: #{tpu_custom_call.1} parent=1 // pred_fallthru
      _
    // Predicated region
    $region26: #{tpu_custom_call.1} parent=1 // pred_check
      _
    $region27: #{tpu_custom_call.1} parent=1 // pred_check_branch
      %49 = sbr.rel (0) target = $region29
    $region28: #{tpu_custom_call.1} parent=1 // pred_region
      %50 = dma.done [#allocation7], 1024
    $region29: #{tpu_custom_call.1} parent=1 // pred_fallthru
      _
    %v52 = vld [vmem:[#allocation3] sm:$0xf]
    %v53 = vld [vmem:[#allocation3 + $0x4] sm:$0xf]
    %v54 = vld [vmem:[#allocation3 + $0x8] sm:$0xf]
    %v55 = vld [vmem:[#allocation3 + $0xc] sm:$0xf]
    %v56 = vld [vmem:[#allocation3 + $0x10] sm:$0xf]
    %v57 = vld [vmem:[#allocation3 + $0x14] sm:$0xf]
    %v58 = vld [vmem:[#allocation3 + $0x18] sm:$0xf]
    %v59 = vld [vmem:[#allocation3 + $0x1c] sm:$0xf]
    %v60 = vld [vmem:[#allocation3 + $0x20] sm:$0xf]
    %v61 = vld [vmem:[#allocation3 + $0x24] sm:$0xf]
    %v62 = vld [vmem:[#allocation3 + $0x28] sm:$0xf]
    %v63 = vld [vmem:[#allocation3 + $0x2c] sm:$0xf]
    %v64 = vld [vmem:[#allocation3 + $0x30] sm:$0xf]
    %v65 = vld [vmem:[#allocation3 + $0x34] sm:$0xf]
    %v66 = vld [vmem:[#allocation3 + $0x38] sm:$0xf]
    %v67 = vld [vmem:[#allocation3 + $0x3c] sm:$0xf]
    %v68 = vld [vmem:[#allocation6] sm:$0xf]
    %v69 = vld [vmem:[#allocation6 + $0x4] sm:$0xf]
    %v70 = vld [vmem:[#allocation6 + $0x8] sm:$0xf]
    %v71 = vld [vmem:[#allocation6 + $0xc] sm:$0xf]
    %v72 = vld [vmem:[#allocation6 + $0x10] sm:$0xf]
    %v73 = vld [vmem:[#allocation6 + $0x14] sm:$0xf]
    %v74 = vld [vmem:[#allocation6 + $0x18] sm:$0xf]
    %v75 = vld [vmem:[#allocation6 + $0x1c] sm:$0xf]
    %v76 = vld [vmem:[#allocation6 + $0x20] sm:$0xf]
    %v77 = vld [vmem:[#allocation6 + $0x24] sm:$0xf]
    %v78 = vld [vmem:[#allocation6 + $0x28] sm:$0xf]
    %v79 = vld [vmem:[#allocation6 + $0x2c] sm:$0xf]
    %v80 = vld [vmem:[#allocation6 + $0x30] sm:$0xf]
    %v81 = vld [vmem:[#allocation6 + $0x34] sm:$0xf]
    %v82 = vld [vmem:[#allocation6 + $0x38] sm:$0xf]
    %v83 = vld [vmem:[#allocation6 + $0x3c] sm:$0xf]
    %v84 = vld [vmem:[%s2] sm:$0x1]
    %v86 = vlaneseq
    %v87 = vshrl.u32 %v86, 7
    %v88 = vsub.s32 0, %v87
    %v89 = vrot.slane %v84, %v88
    %v107 = vunpack.c.l.b16 %v52
    %v108 = vunpack.c.l.b16 %v53
    %v109 = vunpack.c.l.b16 %v54
    %v110 = vunpack.c.l.b16 %v55
    %v111 = vunpack.c.l.b16 %v56
    %v112 = vunpack.c.l.b16 %v57
    %v113 = vunpack.c.l.b16 %v58
    %v114 = vunpack.c.l.b16 %v59
    %v115 = vunpack.c.l.b16 %v60
    %v116 = vunpack.c.l.b16 %v61
    %v117 = vunpack.c.l.b16 %v62
    %v118 = vunpack.c.l.b16 %v63
    %v119 = vunpack.c.l.b16 %v64
    %v120 = vunpack.c.l.b16 %v65
    %v121 = vunpack.c.l.b16 %v66
    %v122 = vunpack.c.l.b16 %v67
    %v123 = vpack.c.b16 %v108, %v107
    %v124 = vpack.c.b16 %v110, %v109
    %v125 = vpack.c.b16 %v112, %v111
    %v126 = vpack.c.b16 %v114, %v113
    %v127 = vpack.c.b16 %v116, %v115
    %v128 = vpack.c.b16 %v118, %v117
    %v129 = vpack.c.b16 %v120, %v119
    %v130 = vpack.c.b16 %v122, %v121
    %v155 = vunpack.c.l.b16 %v68
    %v156 = vunpack.c.l.b16 %v69
    %v157 = vunpack.c.l.b16 %v70
    %v158 = vunpack.c.l.b16 %v71
    %v159 = vunpack.c.l.b16 %v72
    %v160 = vunpack.c.l.b16 %v73
    %v161 = vunpack.c.l.b16 %v74
    %v162 = vunpack.c.l.b16 %v75
    %v163 = vunpack.c.l.b16 %v76
    %v164 = vunpack.c.l.b16 %v77
    %v165 = vunpack.c.l.b16 %v78
    %v166 = vunpack.c.l.b16 %v79
    %v167 = vunpack.c.l.b16 %v80
    %v168 = vunpack.c.l.b16 %v81
    %v169 = vunpack.c.l.b16 %v82
    %v170 = vunpack.c.l.b16 %v83
    %v171 = vpack.c.b16 %v156, %v155
    %v172 = vpack.c.b16 %v158, %v157
    %v173 = vpack.c.b16 %v160, %v159
    %v174 = vpack.c.b16 %v162, %v161
    %v175 = vpack.c.b16 %v164, %v163
    %v176 = vpack.c.b16 %v166, %v165
    %v177 = vpack.c.b16 %v168, %v167
    %v178 = vpack.c.b16 %v170, %v169
    %187 = vmatprep.subr.bf16.mxu0 0
    %188 = vmatpush1.bf16.msra.mxu0 %v171
    %189 = vmatprep.subr.bf16.mxu0 0
    %190 = vmatpush1.bf16.msra.mxu0 %v172
    %191 = vmatprep.subr.bf16.mxu0 0
    %192 = vmatpush1.bf16.msra.mxu0 %v173
    %193 = vmatprep.subr.bf16.mxu0 0
    %194 = vmatpush1.bf16.msra.mxu0 %v174
    %195 = vmatprep.subr.bf16.mxu0 0
    %196 = vmatpush1.bf16.msra.mxu0 %v175
    %197 = vmatprep.subr.bf16.mxu0 0
    %198 = vmatpush1.bf16.msra.mxu0 %v176
    %199 = vmatprep.subr.bf16.mxu0 0
    %200 = vmatpush1.bf16.msra.mxu0 %v177
    %201 = vmatprep.subr.bf16.mxu0 0
    %202 = vmatpush1.bf16.msra.mxu0 %v178
    %203 = vmatprep.subr.bf16.mxu0 0
    %204 = vmatpush1.bf16.msra.mxu0 0
    %205 = vmatprep.subr.bf16.mxu0 0
    %206 = vmatpush1.bf16.msra.mxu0 0
    %207 = vmatprep.subr.bf16.mxu0 0
    %208 = vmatpush1.bf16.msra.mxu0 0
    %209 = vmatprep.subr.bf16.mxu0 0
    %210 = vmatpush1.bf16.msra.mxu0 0
    %211 = vmatprep.subr.bf16.mxu0 0
    %212 = vmatpush1.bf16.msra.mxu0 0
    %213 = vmatprep.subr.bf16.mxu0 0
    %214 = vmatpush1.bf16.msra.mxu0 0
    %215 = vmatprep.subr.bf16.mxu0 0
    %216 = vmatpush1.bf16.msra.mxu0 0
    %217 = vmatprep.subr.bf16.mxu0 0
    %218 = vmatpush1.bf16.msra.mxu0 0
    %219 = vmatprep.mubr.bf16.mxu0 0
    %220 = vmatmul.mubr.bf16.gmra.mrb[0].mxu0 %v123
    %v221 = vpop.f32.mrb[0].mxu0
    %v222 = vadd.f32 %v89, %v221
    %v223 = vpop.f32.mrb[0].mxu0
    %v224 = vpop.f32.mrb[0].mxu0
    %v225 = vadd.f32 %v89, %v224
    %v226 = vpop.f32.mrb[0].mxu0
    %227 = vmatprep.mubr.bf16.mxu0 0
    %228 = vmatmul.mubr.bf16.gmra.mrb[0].mxu0 %v124
    %v229 = vpop.f32.mrb[0].mxu0
    %v230 = vadd.f32 %v89, %v229
    %v231 = vpop.f32.mrb[0].mxu0
    %v232 = vpop.f32.mrb[0].mxu0
    %v233 = vadd.f32 %v89, %v232
    %v234 = vpop.f32.mrb[0].mxu0
    %235 = vmatprep.mubr.bf16.mxu0 0
    %236 = vmatmul.mubr.bf16.gmra.mrb[0].mxu0 %v125
    %v237 = vpop.f32.mrb[0].mxu0
    %v238 = vadd.f32 %v89, %v237
    %v239 = vpop.f32.mrb[0].mxu0
    %v240 = vpop.f32.mrb[0].mxu0
    %v241 = vadd.f32 %v89, %v240
    %v242 = vpop.f32.mrb[0].mxu0
    %243 = vmatprep.mubr.bf16.mxu0 0
    %244 = vmatmul.mubr.bf16.gmra.mrb[0].mxu0 %v126
    %v245 = vpop.f32.mrb[0].mxu0
    %v246 = vadd.f32 %v89, %v245
    %v247 = vpop.f32.mrb[0].mxu0
    %v248 = vpop.f32.mrb[0].mxu0
    %v249 = vadd.f32 %v89, %v248
    %v250 = vpop.f32.mrb[0].mxu0
    %251 = vmatprep.mubr.bf16.mxu0 0
    %252 = vmatmul.mubr.bf16.gmra.mrb[0].mxu0 %v127
    %v253 = vpop.f32.mrb[0].mxu0
    %v254 = vadd.f32 %v89, %v253
    %v255 = vpop.f32.mrb[0].mxu0
    %v256 = vpop.f32.mrb[0].mxu0
    %v257 = vadd.f32 %v89, %v256
    %v258 = vpop.f32.mrb[0].mxu0
    %259 = vmatprep.mubr.bf16.mxu0 0
    %260 = vmatmul.mubr.bf16.gmra.mrb[0].mxu0 %v128
    %v261 = vpop.f32.mrb[0].mxu0
    %v262 = vadd.f32 %v89, %v261
    %v263 = vpop.f32.mrb[0].mxu0
    %v264 = vpop.f32.mrb[0].mxu0
    %v265 = vadd.f32 %v89, %v264
    %v266 = vpop.f32.mrb[0].mxu0
    %267 = vmatprep.mubr.bf16.mxu0 0
    %268 = vmatmul.mubr.bf16.gmra.mrb[0].mxu0 %v129
    %v269 = vpop.f32.mrb[0].mxu0
    %v270 = vadd.f32 %v89, %v269
    %v271 = vpop.f32.mrb[0].mxu0
    %v272 = vpop.f32.mrb[0].mxu0
    %v273 = vadd.f32 %v89, %v272
    %v274 = vpop.f32.mrb[0].mxu0
    %275 = vmatprep.mubr.bf16.mxu0 0
    %276 = vmatmul.mubr.bf16.gmra.mrb[0].mxu0 %v130
    %v277 = vpop.f32.mrb[0].mxu0
    %v278 = vadd.f32 %v89, %v277
    %v279 = vpop.f32.mrb[0].mxu0
    %v280 = vpop.f32.mrb[0].mxu0
    %v281 = vadd.f32 %v89, %v280
    %v282 = vpop.f32.mrb[0].mxu0
    %283 = vdwg.mxu0
    %vm284 = vcmp.ge.f32.partialorder %v222, 0.0
    %vm285 = vcmp.ge.f32.partialorder %v225, 0.0
    %vm286 = vcmp.ge.f32.partialorder %v230, 0.0
    %vm287 = vcmp.ge.f32.partialorder %v233, 0.0
    %vm288 = vcmp.ge.f32.partialorder %v238, 0.0
    %vm289 = vcmp.ge.f32.partialorder %v241, 0.0
    %vm290 = vcmp.ge.f32.partialorder %v246, 0.0
    %vm291 = vcmp.ge.f32.partialorder %v249, 0.0
    %vm292 = vcmp.ge.f32.partialorder %v254, 0.0
    %vm293 = vcmp.ge.f32.partialorder %v257, 0.0
    %vm294 = vcmp.ge.f32.partialorder %v262, 0.0
    %vm295 = vcmp.ge.f32.partialorder %v265, 0.0
    %vm296 = vcmp.ge.f32.partialorder %v270, 0.0
    %vm297 = vcmp.ge.f32.partialorder %v273, 0.0
    %vm298 = vcmp.ge.f32.partialorder %v278, 0.0
    %vm299 = vcmp.ge.f32.partialorder %v281, 0.0
    %v300 = vmul.f32 %v222, 0.01
    %v301 = vmul.f32 %v225, 0.01
    %v302 = vmul.f32 %v230, 0.01
    %v303 = vmul.f32 %v233, 0.01
    %v304 = vmul.f32 %v238, 0.01
    %v305 = vmul.f32 %v241, 0.01
    %v306 = vmul.f32 %v246, 0.01
    %v307 = vmul.f32 %v249, 0.01
    %v308 = vmul.f32 %v254, 0.01
    %v309 = vmul.f32 %v257, 0.01
    %v310 = vmul.f32 %v262, 0.01
    %v311 = vmul.f32 %v265, 0.01
    %v312 = vmul.f32 %v270, 0.01
    %v313 = vmul.f32 %v273, 0.01
    %v314 = vmul.f32 %v278, 0.01
    %v315 = vmul.f32 %v281, 0.01
    %v316 = vsel %vm284, %v222, %v300
    %v317 = vsel %vm285, %v225, %v301
    %v318 = vsel %vm286, %v230, %v302
    %v319 = vsel %vm287, %v233, %v303
    %v320 = vsel %vm288, %v238, %v304
    %v321 = vsel %vm289, %v241, %v305
    %v322 = vsel %vm290, %v246, %v306
    %v323 = vsel %vm291, %v249, %v307
    %v324 = vsel %vm292, %v254, %v308
    %v325 = vsel %vm293, %v257, %v309
    %v326 = vsel %vm294, %v262, %v310
    %v327 = vsel %vm295, %v265, %v311
    %v328 = vsel %vm296, %v270, %v312
    %v329 = vsel %vm297, %v273, %v313
    %v330 = vsel %vm298, %v278, %v314
    %v331 = vsel %vm299, %v281, %v315
    %v332 = vld [vmem:[%s3] sm:$0x1]
    %v334 = vlaneseq
    %v335 = vshrl.u32 %v334, 7
    %v336 = vsub.s32 0, %v335
    %v337 = vrot.slane %v332, %v336
    %v339 = vmul.f32 %v316, %v337
    %v340 = vmul.f32 %v317, %v337
    %v341 = vmul.f32 %v318, %v337
    %v342 = vmul.f32 %v319, %v337
    %v343 = vmul.f32 %v320, %v337
    %v344 = vmul.f32 %v321, %v337
    %v345 = vmul.f32 %v322, %v337
    %v346 = vmul.f32 %v323, %v337
    %v347 = vmul.f32 %v324, %v337
    %v348 = vmul.f32 %v325, %v337
    %v349 = vmul.f32 %v326, %v337
    %v350 = vmul.f32 %v327, %v337
    %v351 = vmul.f32 %v328, %v337
    %v352 = vmul.f32 %v329, %v337
    %v353 = vmul.f32 %v330, %v337
    %v354 = vmul.f32 %v331, %v337
    %355 = vadd.xlane.f32.xlu0 %v339
    %v356 = vpop.xlane.xlu0 %355
    %357 = vadd.xlane.f32.xlu0 %v340
    %v358 = vpop.xlane.xlu0 %357
    %359 = vadd.xlane.f32.xlu0 %v341
    %v360 = vpop.xlane.xlu0 %359
    %361 = vadd.xlane.f32.xlu0 %v342
    %v362 = vpop.xlane.xlu0 %361
    %363 = vadd.xlane.f32.xlu0 %v343
    %v364 = vpop.xlane.xlu0 %363
    %365 = vadd.xlane.f32.xlu0 %v344
    %v366 = vpop.xlane.xlu0 %365
    %367 = vadd.xlane.f32.xlu0 %v345
    %v368 = vpop.xlane.xlu0 %367
    %369 = vadd.xlane.f32.xlu0 %v346
    %v370 = vpop.xlane.xlu0 %369
    %371 = vadd.xlane.f32.xlu0 %v347
    %v372 = vpop.xlane.xlu0 %371
    %373 = vadd.xlane.f32.xlu0 %v348
    %v374 = vpop.xlane.xlu0 %373
    %375 = vadd.xlane.f32.xlu0 %v349
    %v376 = vpop.xlane.xlu0 %375
    %377 = vadd.xlane.f32.xlu0 %v350
    %v378 = vpop.xlane.xlu0 %377
    %379 = vadd.xlane.f32.xlu0 %v351
    %v380 = vpop.xlane.xlu0 %379
    %381 = vadd.xlane.f32.xlu0 %v352
    %v382 = vpop.xlane.xlu0 %381
    %383 = vadd.xlane.f32.xlu0 %v353
    %v384 = vpop.xlane.xlu0 %383
    %385 = vadd.xlane.f32.xlu0 %v354
    %v386 = vpop.xlane.xlu0 %385
    %v387 = vld [vmem:[#allocation2] sm:$0x1]
    %389 = vset.pattern.permute.xlu0 0
    %390 = vperm.xlu0 %389, %v387
    %v391 = vpop.permute.xlu0 %390
    %v393 = vlaneseq
    %v394 = vshrl.u32 %v393, 7
    %v395 = vsub.s32 0, %v394
    %v396 = vrot.slane %v391, %v395
    %v397 = vadd.f32 %v356, %v396
    %v398 = vadd.f32 %v358, %v396
    %v399 = vadd.f32 %v360, %v396
    %v400 = vadd.f32 %v362, %v396
    %v401 = vadd.f32 %v364, %v396
    %v402 = vadd.f32 %v366, %v396
    %v403 = vadd.f32 %v368, %v396
    %v404 = vadd.f32 %v370, %v396
    %v405 = vadd.f32 %v372, %v396
    %v406 = vadd.f32 %v374, %v396
    %v407 = vadd.f32 %v376, %v396
    %v408 = vadd.f32 %v378, %v396
    %v409 = vadd.f32 %v380, %v396
    %v410 = vadd.f32 %v382, %v396
    %v411 = vadd.f32 %v384, %v396
    %v412 = vadd.f32 %v386, %v396
    %v413 = vand.u32 2147483647, %v397
    %v414 = vand.u32 2147483647, %v398
    %v415 = vand.u32 2147483647, %v399
    %v416 = vand.u32 2147483647, %v400
    %v417 = vand.u32 2147483647, %v401
    %v418 = vand.u32 2147483647, %v402
    %v419 = vand.u32 2147483647, %v403
    %v420 = vand.u32 2147483647, %v404
    %v421 = vand.u32 2147483647, %v405
    %v422 = vand.u32 2147483647, %v406
    %v423 = vand.u32 2147483647, %v407
    %v424 = vand.u32 2147483647, %v408
    %v425 = vand.u32 2147483647, %v409
    %v426 = vand.u32 2147483647, %v410
    %v427 = vand.u32 2147483647, %v411
    %v428 = vand.u32 2147483647, %v412
    %v429 = vsub.f32 0.0, %v413
    %v430 = vsub.f32 0.0, %v414
    %v431 = vsub.f32 0.0, %v415
    %v432 = vsub.f32 0.0, %v416
    %v433 = vsub.f32 0.0, %v417
    %v434 = vsub.f32 0.0, %v418
    %v435 = vsub.f32 0.0, %v419
    %v436 = vsub.f32 0.0, %v420
    %v437 = vsub.f32 0.0, %v421
    %v438 = vsub.f32 0.0, %v422
    %v439 = vsub.f32 0.0, %v423
    %v440 = vsub.f32 0.0, %v424
    %v441 = vsub.f32 0.0, %v425
    %v442 = vsub.f32 0.0, %v426
    %v443 = vsub.f32 0.0, %v427
    %v444 = vsub.f32 0.0, %v428
    %v445 = vmul.f32 %v429, 1.442695
    %v446 = vpow.pop %v445
    %v447 = vmul.f32 %v430, 1.442695
    %v448 = vpow.pop %v447
    %v449 = vmul.f32 %v431, 1.442695
    %v450 = vpow.pop %v449
    %v451 = vmul.f32 %v432, 1.442695
    %v452 = vpow.pop %v451
    %v453 = vmul.f32 %v433, 1.442695
    %v454 = vpow.pop %v453
    %v455 = vmul.f32 %v434, 1.442695
    %v456 = vpow.pop %v455
    %v457 = vmul.f32 %v435, 1.442695
    %v458 = vpow.pop %v457
    %v459 = vmul.f32 %v436, 1.442695
    %v460 = vpow.pop %v459
    %v461 = vmul.f32 %v437, 1.442695
    %v462 = vpow.pop %v461
    %v463 = vmul.f32 %v438, 1.442695
    %v464 = vpow.pop %v463
    %v465 = vmul.f32 %v439, 1.442695
    %v466 = vpow.pop %v465
    %v467 = vmul.f32 %v440, 1.442695
    %v468 = vpow.pop %v467
    %v469 = vmul.f32 %v441, 1.442695
    %v470 = vpow.pop %v469
    %v471 = vmul.f32 %v442, 1.442695
    %v472 = vpow.pop %v471
    %v473 = vmul.f32 %v443, 1.442695
    %v474 = vpow.pop %v473
    %v475 = vmul.f32 %v444, 1.442695
    %v476 = vpow.pop %v475
    %v477 = vadd.f32 %v446, 1.0
    %v478 = vadd.f32 %v448, 1.0
    %v479 = vadd.f32 %v450, 1.0
    %v480 = vadd.f32 %v452, 1.0
    %v481 = vadd.f32 %v454, 1.0
    %v482 = vadd.f32 %v456, 1.0
    %v483 = vadd.f32 %v458, 1.0
    %v484 = vadd.f32 %v460, 1.0
    %v485 = vadd.f32 %v462, 1.0
    %v486 = vadd.f32 %v464, 1.0
    %v487 = vadd.f32 %v466, 1.0
    %v488 = vadd.f32 %v468, 1.0
    %v489 = vadd.f32 %v470, 1.0
    %v490 = vadd.f32 %v472, 1.0
    %v491 = vadd.f32 %v474, 1.0
    %v492 = vadd.f32 %v476, 1.0
    %v493 = vrcp.pop %v477
    %v494 = vrcp.pop %v478
    %v495 = vrcp.pop %v479
    %v496 = vrcp.pop %v480
    %v497 = vrcp.pop %v481
    %v498 = vrcp.pop %v482
    %v499 = vrcp.pop %v483
    %v500 = vrcp.pop %v484
    %v501 = vrcp.pop %v485
    %v502 = vrcp.pop %v486
    %v503 = vrcp.pop %v487
    %v504 = vrcp.pop %v488
    %v505 = vrcp.pop %v489
    %v506 = vrcp.pop %v490
    %v507 = vrcp.pop %v491
    %v508 = vrcp.pop %v492
    %vm509 = vcmp.ge.f32.partialorder %v397, 0.0
    %vm510 = vcmp.ge.f32.partialorder %v398, 0.0
    %vm511 = vcmp.ge.f32.partialorder %v399, 0.0
    %vm512 = vcmp.ge.f32.partialorder %v400, 0.0
    %vm513 = vcmp.ge.f32.partialorder %v401, 0.0
    %vm514 = vcmp.ge.f32.partialorder %v402, 0.0
    %vm515 = vcmp.ge.f32.partialorder %v403, 0.0
    %vm516 = vcmp.ge.f32.partialorder %v404, 0.0
    %vm517 = vcmp.ge.f32.partialorder %v405, 0.0
    %vm518 = vcmp.ge.f32.partialorder %v406, 0.0
    %vm519 = vcmp.ge.f32.partialorder %v407, 0.0
    %vm520 = vcmp.ge.f32.partialorder %v408, 0.0
    %vm521 = vcmp.ge.f32.partialorder %v409, 0.0
    %vm522 = vcmp.ge.f32.partialorder %v410, 0.0
    %vm523 = vcmp.ge.f32.partialorder %v411, 0.0
    %vm524 = vcmp.ge.f32.partialorder %v412, 0.0
    %v525 = vmul.f32 %v446, %v493
    %v526 = vmul.f32 %v448, %v494
    %v527 = vmul.f32 %v450, %v495
    %v528 = vmul.f32 %v452, %v496
    %v529 = vmul.f32 %v454, %v497
    %v530 = vmul.f32 %v456, %v498
    %v531 = vmul.f32 %v458, %v499
    %v532 = vmul.f32 %v460, %v500
    %v533 = vmul.f32 %v462, %v501
    %v534 = vmul.f32 %v464, %v502
    %v535 = vmul.f32 %v466, %v503
    %v536 = vmul.f32 %v468, %v504
    %v537 = vmul.f32 %v470, %v505
    %v538 = vmul.f32 %v472, %v506
    %v539 = vmul.f32 %v474, %v507
    %v540 = vmul.f32 %v476, %v508
    %v541 = vsel %vm509, %v493, %v525
    %v542 = vsel %vm510, %v494, %v526
    %v543 = vsel %vm511, %v495, %v527
    %v544 = vsel %vm512, %v496, %v528
    %v545 = vsel %vm513, %v497, %v529
    %v546 = vsel %vm514, %v498, %v530
    %v547 = vsel %vm515, %v499, %v531
    %v548 = vsel %vm516, %v500, %v532
    %v549 = vsel %vm517, %v501, %v533
    %v550 = vsel %vm518, %v502, %v534
    %v551 = vsel %vm519, %v503, %v535
    %v552 = vsel %vm520, %v504, %v536
    %v553 = vsel %vm521, %v505, %v537
    %v554 = vsel %vm522, %v506, %v538
    %v555 = vsel %vm523, %v507, %v539
    %v556 = vsel %vm524, %v508, %v540
    %v573 = vlaneseq
    %v574 = vand.u32 %v573, 127
    %v575 = vlaneseq
    %v576 = vshrl.u32 %v575, 7
    %v577 = vsub.s32 %v574, %v576
    %v578 = vrot.slane %v541, %v577
    %v579 = vadd.s32 %v574, 4294967288
    %v580 = vlaneseq
    %v581 = vshrl.u32 %v580, 7
    %v582 = vsub.s32 %v579, %v581
    %v583 = vrot.slane %v542, %v582
    %vm584 = vcmask 130112
    %v585 = vsel %vm584, %v583, %v578
    %v586 = vadd.s32 %v574, 4294967280
    %v587 = vlaneseq
    %v588 = vshrl.u32 %v587, 7
    %v589 = vsub.s32 %v586, %v588
    %v590 = vrot.slane %v543, %v589
    %vm591 = vcmask 195712
    %v592 = vsel %vm591, %v590, %v585
    %v593 = vadd.s32 %v574, 4294967272
    %v594 = vlaneseq
    %v595 = vshrl.u32 %v594, 7
    %v596 = vsub.s32 %v593, %v595
    %v597 = vrot.slane %v544, %v596
    %vm598 = vcmask 261312
    %v599 = vsel %vm598, %v597, %v592
    %v600 = vadd.s32 %v574, 4294967264
    %v601 = vlaneseq
    %v602 = vshrl.u32 %v601, 7
    %v603 = vsub.s32 %v600, %v602
    %v604 = vrot.slane %v545, %v603
    %vm605 = vcmask 326912
    %v606 = vsel %vm605, %v604, %v599
    %v607 = vadd.s32 %v574, 4294967256
    %v608 = vlaneseq
    %v609 = vshrl.u32 %v608, 7
    %v610 = vsub.s32 %v607, %v609
    %v611 = vrot.slane %v546, %v610
    %vm612 = vcmask 392512
    %v613 = vsel %vm612, %v611, %v606
    %v614 = vadd.s32 %v574, 4294967248
    %v615 = vlaneseq
    %v616 = vshrl.u32 %v615, 7
    %v617 = vsub.s32 %v614, %v616
    %v618 = vrot.slane %v547, %v617
    %vm619 = vcmask 458112
    %v620 = vsel %vm619, %v618, %v613
    %v621 = vadd.s32 %v574, 4294967240
    %v622 = vlaneseq
    %v623 = vshrl.u32 %v622, 7
    %v624 = vsub.s32 %v621, %v623
    %v625 = vrot.slane %v548, %v624
    %vm626 = vcmask 523712
    %v627 = vsel %vm626, %v625, %v620
    %v628 = vadd.s32 %v574, 4294967232
    %v629 = vlaneseq
    %v630 = vshrl.u32 %v629, 7
    %v631 = vsub.s32 %v628, %v630
    %v632 = vrot.slane %v549, %v631
    %vm633 = vcmask 589312
    %v634 = vsel %vm633, %v632, %v627
    %v635 = vadd.s32 %v574, 4294967224
    %v636 = vlaneseq
    %v637 = vshrl.u32 %v636, 7
    %v638 = vsub.s32 %v635, %v637
    %v639 = vrot.slane %v550, %v638
    %vm640 = vcmask 654912
    %v641 = vsel %vm640, %v639, %v634
    %v642 = vadd.s32 %v574, 4294967216
    %v643 = vlaneseq
    %v644 = vshrl.u32 %v643, 7
    %v645 = vsub.s32 %v642, %v644
    %v646 = vrot.slane %v551, %v645
    %vm647 = vcmask 720512
    %v648 = vsel %vm647, %v646, %v641
    %v649 = vadd.s32 %v574, 4294967208
    %v650 = vlaneseq
    %v651 = vshrl.u32 %v650, 7
    %v652 = vsub.s32 %v649, %v651
    %v653 = vrot.slane %v552, %v652
    %vm654 = vcmask 786112
    %v655 = vsel %vm654, %v653, %v648
    %v656 = vadd.s32 %v574, 4294967200
    %v657 = vlaneseq
    %v658 = vshrl.u32 %v657, 7
    %v659 = vsub.s32 %v656, %v658
    %v660 = vrot.slane %v553, %v659
    %vm661 = vcmask 851712
    %v662 = vsel %vm661, %v660, %v655
    %v663 = vadd.s32 %v574, 4294967192
    %v664 = vlaneseq
    %v665 = vshrl.u32 %v664, 7
    %v666 = vsub.s32 %v663, %v665
    %v667 = vrot.slane %v554, %v666
    %vm668 = vcmask 917312
    %v669 = vsel %vm668, %v667, %v662
    %v670 = vadd.s32 %v574, 4294967184
    %v671 = vlaneseq
    %v672 = vshrl.u32 %v671, 7
    %v673 = vsub.s32 %v670, %v672
    %v674 = vrot.slane %v555, %v673
    %vm675 = vcmask 982912
    %v676 = vsel %vm675, %v674, %v669
    %v677 = vadd.s32 %v574, 4294967176
    %v678 = vlaneseq
    %v679 = vshrl.u32 %v678, 7
    %v680 = vsub.s32 %v677, %v679
    %v681 = vrot.slane %v556, %v680
    %vm682 = vcmask 1048512
    %v683 = vsel %vm682, %v681, %v676
    %685 = vst [vmem:[#allocation8] sm:$0x1] %v683
    // Predicated region
    $region30: #{tpu_custom_call.1} parent=1 // pred_check
      _
    $region31: #{tpu_custom_call.1} parent=1 // pred_check_branch
      %687 = sbr.rel (0) target = $region33
    $region32: #{tpu_custom_call.1} parent=1 // pred_region
      %s689 = ssub.s32 16, 16
      %690 = vsyncadd [#allocation5], %s689
      %s692 = sshll.u32 [#allocation8], 4
      %s693 = int_to_ptr.vmem [resolvable:$true] %s692
      %695 = dma.vmem_to_hbm [thread:$0]  %s693, 16, %s5, [#allocation5]
    $region33: #{tpu_custom_call.1} parent=1 // pred_fallthru
      _
    // Predicated region
    $region34: #{tpu_custom_call.1} parent=1 // pred_check
      _
    $region35: #{tpu_custom_call.1} parent=1 // pred_check_branch
      %697 = sbr.rel (0) target = $region37
    $region36: #{tpu_custom_call.1} parent=1 // pred_region
      %698 = dma.done [#allocation5], 16
    $region37: #{tpu_custom_call.1} parent=1 // pred_fallthru
      _
    %699 = vsyncpa [#allocation4], 1
    %700 = vsyncpa [#allocation7], 1
    %701 = vsyncpa [#allocation5], 1

</llo_original>
